<compile_context>
chip_gen: v7x
topology: tpu7x:2x2x1
jax: 0.10.0
libtpu: 0.0.40
codegen_flags: <defaults>
</compile_context>

<pallas_src>
from functools import partial

import jax
import jax.numpy as jnp
from jax.experimental import pallas as pl
from jax.experimental.pallas import tpu as pltpu


# ----------------------------------------------------------------------------
# Kernels
# ----------------------------------------------------------------------------
def decoder_step_kernel(idx_ref, ctx_ref, wfull_ref, bfull_ref, h_ref, c_ref,
                        h_out_ref, c_out_ref, xemb_ref):
    """Single LSTM decode step, fully fused into one MXU matmul."""
    B, D = h_ref.shape[1], h_ref.shape[2]
    V = wfull_ref.shape[0] - ctx_ref.shape[1] - D          # vocab size
    idx = idx_ref[...]                                      # [B, 1] int32 (VMEM)

    # one-hot via iota compare (VPU) -- replaces the scalar-indexed gather chain
    onehot = (jax.lax.broadcasted_iota(jnp.int32, (B, V), 1) == idx
              ).astype(jnp.float32)                          # [B, V]

    h0 = h_ref[0]                                            # [B, D]
    c0 = c_ref[0]                                            # [B, D]

    # single fused MXU matmul: [gates | x_emb] = [ctx | onehot | h] @ W_full + b_full
    xin = jnp.concatenate([ctx_ref[...], onehot, h0], axis=-1)       # [B, 2D+V+D]
    out = (jnp.dot(xin, wfull_ref[...], preferred_element_type=jnp.float32)
           + bfull_ref[...])                                          # [B, 4D+E]

    # gate columns permuted offline to (i, f, o | g): two activation calls
    sig = jax.nn.sigmoid(out[:, :3 * D])
    g_g = jnp.tanh(out[:, 3 * D:4 * D])
    i_g = sig[:, 0:D]
    f_g = sig[:, D:2 * D]
    o_g = sig[:, 2 * D:3 * D]

    c_new = f_g * c0 + i_g * g_g
    h_new = o_g * jnp.tanh(c_new)

    h_out_ref[0] = h_new                  # [1, B, D] (aliased onto h_in)
    c_out_ref[0] = c_new                  # [1, B, D] (aliased onto c_in)
    xemb_ref[...] = out[:, 4 * D:]        # [B, E]


def decoder_seq_kernel(ids_ref, ctx_ref, wfull_ref, bfull_ref, h0_ref, c0_ref,
                       op_ref, xemb_ref, c_fin_ref,
                       h_sc, c_sc, ctxb_sc):
    """T decode steps hoisted into the kernel grid (grid=(T,), 'arbitrary')."""
    t = pl.program_id(0)
    B, D = h0_ref.shape[1], h0_ref.shape[2]
    TWO_D = ctx_ref.shape[1]
    V = wfull_ref.shape[0] - TWO_D - D

    @pl.when(t == 0)
    def _():
        h_sc[...] = h0_ref[0]
        c_sc[...] = c0_ref[0]
        # context projection computed once per sequence and reused as a bias
        ctxb_sc[...] = (jnp.dot(ctx_ref[...], wfull_ref[:TWO_D, :],
                                preferred_element_type=jnp.float32)
                        + bfull_ref[...])                             # [B, 4D+E]

    idx = ids_ref[0]                                                  # [B, 1] int32
    onehot = (jax.lax.broadcasted_iota(jnp.int32, (B, V), 1) == idx
              ).astype(jnp.float32)                                   # [B, V]

    h_prev = h_sc[...]
    c_prev = c_sc[...]

    # per-step matmul contracts only [onehot | h]  (K = V + D)
    xin = jnp.concatenate([onehot, h_prev], axis=-1)                  # [B, V+D]
    out = ctxb_sc[...] + jnp.dot(xin, wfull_ref[TWO_D:, :],
                                 preferred_element_type=jnp.float32)  # [B, 4D+E]

    sig = jax.nn.sigmoid(out[:, :3 * D])
    g_g = jnp.tanh(out[:, 3 * D:4 * D])
    c_new = sig[:, D:2 * D] * c_prev + sig[:, 0:D] * g_g
    h_new = sig[:, 2 * D:3 * D] * jnp.tanh(c_new)

    h_sc[...] = h_new
    c_sc[...] = c_new
    op_ref[0] = h_new                    # per-step output slab [1, B, D]
    xemb_ref[0] = out[:, 4 * D:]         # per-step embedding [1, B, E]
    c_fin_ref[0] = c_new                 # resident; final value written back at end


# ----------------------------------------------------------------------------
# Offline weight fusion
# ----------------------------------------------------------------------------
def prepare_fused_params(params):
    """Fold emb, to_emb and both LSTM projections into one [2D+V+D, 4D+E] matrix.

    gates = ctx @ (W_te[:2D] @ W_ih) + onehot @ (emb @ W_te[2D:] @ W_ih)
            + h @ W_hh + (b_te @ W_ih + b_ih + b_hh)
    x_emb = onehot @ emb
    Gate columns permuted from PyTorch (i, f, g, o) to (i, f, o, g).
    """
    D = params["w_hh"].shape[0]
    V, E = params["emb"].shape
    hp = jax.lax.Precision.HIGHEST

    w_te_ctx = params["w_te"][:2 * D]                                  # [2D, E]
    w_te_emb = params["w_te"][2 * D:]                                  # [E, E]

    w_ctx_g = jnp.dot(w_te_ctx, params["w_ih"], precision=hp)          # [2D, 4D]
    w_tok_g = jnp.dot(jnp.dot(params["emb"], w_te_emb, precision=hp),
                      params["w_ih"], precision=hp)                    # [V, 4D]
    w_h_g = params["w_hh"]                                             # [D, 4D]
    b_g = (jnp.dot(params["b_te"], params["w_ih"], precision=hp)
           + params["b_ih"] + params["b_hh"])                          # [1, 4D]

    perm = jnp.concatenate([jnp.arange(0, 2 * D),
                            jnp.arange(3 * D, 4 * D),
                            jnp.arange(2 * D, 3 * D)])
    w_gates = jnp.concatenate([w_ctx_g, w_tok_g, w_h_g], axis=0)[:, perm]   # [K, 4D]
    w_emb_cols = jnp.concatenate([jnp.zeros((2 * D, E), jnp.float32),
                                  params["emb"],
                                  jnp.zeros((D, E), jnp.float32)], axis=0)  # [K, E]
    w_full = jnp.concatenate([w_gates, w_emb_cols], axis=1)                 # [K, 4D+E]
    b_full = jnp.concatenate([b_g[:, perm],
                              jnp.zeros((1, E), jnp.float32)], axis=1)      # [1, 4D+E]
    return {"w_full": w_full, "b_full": b_full}


# ----------------------------------------------------------------------------
# Wrappers
# ----------------------------------------------------------------------------
@partial(jax.jit, donate_argnums=(1,))          # donate hid -> real in-place aliasing
def decoder_forward(x_idx, hid, context, fused):
    """Module-equivalent single step.
    x_idx: [B,1] int32 ids; hid: (h, c) each [1,B,D]; context: [B,2D]."""
    h_in, c_in = hid
    B, D = h_in.shape[1], h_in.shape[2]
    E = fused["w_full"].shape[1] - 4 * D
    idx = x_idx.astype(jnp.int32)                                       # [B, 1]

    vmem = pl.BlockSpec(memory_space=pltpu.MemorySpace.VMEM)

    h_new, c_new, x_emb = pl.pallas_call(
        decoder_step_kernel,
        out_shape=(jax.ShapeDtypeStruct((1, B, D), jnp.float32),
                   jax.ShapeDtypeStruct((1, B, D), jnp.float32),
                   jax.ShapeDtypeStruct((B, E), jnp.float32)),
        in_specs=[vmem] * 6,
        out_specs=(vmem, vmem, vmem),
        # recurrent state updated in place: h_in -> h_out, c_in -> c_out
        input_output_aliases={4: 0, 5: 1},
    )(idx, context, fused["w_full"], fused["b_full"], h_in, c_in)

    op = h_new.reshape(B, 1, D)          # byte-identical to h_new: free reshape
    return op, (h_new, c_new), x_emb.reshape(B, 1, E)


@jax.jit
def decoder_decode_steps(ids_seq, hid, context, fused):
    """T decode steps in one pallas_call (teacher-forced ids known upfront).
    ids_seq: [T,B] int32; returns (ops [T,B,D], (h,c) each [1,B,D], x_embs [T,B,E])."""
    h_in, c_in = hid
    T, B = ids_seq.shape
    D = h_in.shape[2]
    K, Wd = fused["w_full"].shape
    E = Wd - 4 * D
    ids = ids_seq.reshape(T, B, 1).astype(jnp.int32)

    grid_spec = pltpu.PrefetchScalarGridSpec(
        num_scalar_prefetch=0,
        grid=(T,),
        in_specs=[pl.BlockSpec((1, B, 1), lambda t: (t, 0, 0)),     # per-step ids
                  pl.BlockSpec((B, 2 * D), lambda t: (0, 0)),        # context (resident)
                  pl.BlockSpec((K, Wd), lambda t: (0, 0)),           # W_full (resident)
                  pl.BlockSpec((1, Wd), lambda t: (0, 0)),           # b_full (resident)
                  pl.BlockSpec((1, B, D), lambda t: (0, 0, 0)),      # h0 (resident)
                  pl.BlockSpec((1, B, D), lambda t: (0, 0, 0))],     # c0 (resident)
        out_specs=[pl.BlockSpec((1, B, D), lambda t: (t, 0, 0)),     # op per step
                   pl.BlockSpec((1, B, E), lambda t: (t, 0, 0)),     # x_emb per step
                   pl.BlockSpec((1, B, D), lambda t: (0, 0, 0))],    # final c
        scratch_shapes=[pltpu.VMEM((B, D), jnp.float32),             # h carry
                        pltpu.VMEM((B, D), jnp.float32),             # c carry
                        pltpu.VMEM((B, Wd), jnp.float32)])           # ctx projection

    ops, xembs, c_fin = pl.pallas_call(
        decoder_seq_kernel,
        out_shape=(jax.ShapeDtypeStruct((T, B, D), jnp.float32),
                   jax.ShapeDtypeStruct((T, B, E), jnp.float32),
                   jax.ShapeDtypeStruct((1, B, D), jnp.float32)),
        grid_spec=grid_spec,
        compiler_params=pltpu.CompilerParams(
            dimension_semantics=("arbitrary",)),                     # recurrent axis
    )(ids, context, fused["w_full"], fused["b_full"], h_in, c_in)

    h_fin = ops[T - 1:T]                 # final h == last step's op slab (free slice)
    return ops, (h_fin, c_fin), xembs


# ----------------------------------------------------------------------------
# Synthetic init + pure-JAX references
# ----------------------------------------------------------------------------
def init_params(key, vocab, emb_size, d_model):
    """Deterministic synthetic init mirroring the PyTorch init scheme."""
    ks = jax.random.split(key, 6)
    trunc_std = 0.0001
    unif_mag = 0.02

    emb = jax.random.normal(ks[0], (vocab, emb_size), jnp.float32)
    w_te = trunc_std * jax.random.normal(ks[1], (2 * d_model + emb_size, emb_size),
                                         jnp.float32)
    b_te = trunc_std * jax.random.normal(ks[2], (1, emb_size), jnp.float32)
    w_ih = jax.random.uniform(ks[3], (emb_size, 4 * d_model), jnp.float32,
                              -unif_mag, unif_mag)
    w_hh = jax.random.uniform(ks[4], (d_model, 4 * d_model), jnp.float32,
                              -unif_mag, unif_mag)
    b = jnp.zeros((1, 4 * d_model), jnp.float32)
    b = b.at[:, d_model:2 * d_model].set(1.0)      # forget-gate bias = 1 (init_lstm_wt)
    return {"emb": emb, "w_te": w_te, "b_te": b_te,
            "w_ih": w_ih, "b_ih": b, "w_hh": w_hh, "b_hh": b}


def reference_forward(x_idx, hid, context, params):
    """Pure-JAX reference (unfused weights)."""
    x_emb = params["emb"][x_idx[:, 0]]
    x1 = jnp.concatenate([context, x_emb], axis=-1)
    x1 = x1 @ params["w_te"] + params["b_te"]
    h0, c0 = hid[0][0], hid[1][0]
    D = h0.shape[-1]
    gates = x1 @ params["w_ih"] + params["b_ih"] + h0 @ params["w_hh"] + params["b_hh"]
    i_g = jax.nn.sigmoid(gates[:, 0 * D:1 * D])
    f_g = jax.nn.sigmoid(gates[:, 1 * D:2 * D])
    g_g = jnp.tanh(gates[:, 2 * D:3 * D])
    o_g = jax.nn.sigmoid(gates[:, 3 * D:4 * D])
    c_new = f_g * c0 + i_g * g_g
    h_new = o_g * jnp.tanh(c_new)
    return h_new[:, None, :], (h_new[None], c_new[None]), x_emb[:, None, :]


def reference_decode_steps(ids_seq, hid, context, params):
    h, c = hid
    ops, xs = [], []
    for t in range(ids_seq.shape[0]):
        op, (h, c), xe = reference_forward(ids_seq[t][:, None], (h, c), context, params)
        ops.append(op[:, 0, :])
        xs.append(xe[:, 0, :])
    return jnp.stack(ops, 0), (h, c), jnp.stack(xs, 0)


# ----------------------------------------------------------------------------
if __name__ == "__main__":
    B, E, D, V, T = 8, 32, 32, 16, 6     # batch, emb_size, d_model, vocab, decode steps

    key = jax.random.PRNGKey(0)
    k_p, k_x, k_ctx, k_h, k_c, k_seq = jax.random.split(key, 6)

    params = init_params(k_p, V, E, D)
    fused = prepare_fused_params(params)          # done once, reused every step

    x = jax.random.randint(k_x, (B, 1), 0, V, dtype=jnp.int32)
    context = jax.random.normal(k_ctx, (B, 2 * D), jnp.float32)
    h0 = jax.random.normal(k_h, (1, B, D), jnp.float32)
    c0 = jax.random.normal(k_c, (1, B, D), jnp.float32)
    hid = (h0, c0)

    # ---- loop-hoisted T-step decode (single pallas_call, grid=(T,)) ---------
    ids_seq = jax.random.randint(k_seq, (T, B), 0, V, dtype=jnp.int32)
    ops_r, hid_seq_r, xs_r = reference_decode_steps(ids_seq, hid, context, params)
    ops, hid_seq, xs = decoder_decode_steps(ids_seq, hid, context, fused)
    jax.block_until_ready((ops, hid_seq, xs))
    assert ops.shape == (T, B, D) and xs.shape == (T, B, E)
    assert jnp.allclose(ops, ops_r, atol=2e-4)
    assert jnp.allclose(xs, xs_r, atol=1e-4)
    assert jnp.allclose(hid_seq[0], hid_seq_r[0], atol=2e-4)
    assert jnp.allclose(hid_seq[1], hid_seq_r[1], atol=2e-4)

    # ---- module-equivalent single step ---------------------------------------
    # reference computed before the kernel call: decoder_forward donates hid.
    op_r, hid_r, x_r = reference_forward(x, hid, context, params)
    jax.block_until_ready((op_r, hid_r, x_r))

    op, hid_new, x_emb = decoder_forward(x, hid, context, fused)
    jax.block_until_ready((op, hid_new, x_emb))

    assert op.shape == (B, 1, D)
    assert hid_new[0].shape == (1, B, D) and hid_new[1].shape == (1, B, D)
    assert x_emb.shape == (B, 1, E)
    # fused single-matmul path reorders f32 accumulation vs. the two-step reference
    assert jnp.allclose(op, op_r, atol=1e-4)
    assert jnp.allclose(hid_new[0], hid_r[0], atol=1e-4)
    assert jnp.allclose(hid_new[1], hid_r[1], atol=1e-4)
    assert jnp.allclose(x_emb, x_r, atol=1e-4)

    print("KERNEL_OK")
</pallas_src>

<mosaic_0001>
module attributes {stable_mosaic.version = 11 : i64} {
  func.func @decoder_seq_kernel(%arg0: i32, %arg1: memref<1x8x1xi32, #tpu.memory_space<vmem>>, %arg2: memref<8x64xf32, #tpu.memory_space<vmem>>, %arg3: memref<112x160xf32, #tpu.memory_space<vmem>>, %arg4: memref<1x160xf32, #tpu.memory_space<vmem>>, %arg5: memref<1x8x32xf32, #tpu.memory_space<vmem>>, %arg6: memref<1x8x32xf32, #tpu.memory_space<vmem>>, %arg7: memref<1x8x32xf32, #tpu.memory_space<vmem>>, %arg8: memref<1x8x32xf32, #tpu.memory_space<vmem>>, %arg9: memref<1x8x32xf32, #tpu.memory_space<vmem>>, %arg10: memref<8x32xf32, #tpu.memory_space<vmem>>, %arg11: memref<8x32xf32, #tpu.memory_space<vmem>>, %arg12: memref<8x160xf32, #tpu.memory_space<vmem>>) attributes {dimension_semantics = [#tpu.dimension_semantics<arbitrary>], iteration_bounds = array<i64: 6>, scalar_prefetch = 0 : i64, scratch_operands = 3 : i64, tpu.core_type = #tpu.core_type<tc>, window_params = [{transform_indices = @transform_0, window_bounds = array<i64: 1, 8, 1>}, {pipeline_mode = #tpu.pipeline_mode<synchronous>, transform_indices = @transform_1, window_bounds = array<i64: 8, 64>}, {pipeline_mode = #tpu.pipeline_mode<synchronous>, transform_indices = @transform_2, window_bounds = array<i64: 112, 160>}, {pipeline_mode = #tpu.pipeline_mode<synchronous>, transform_indices = @transform_3, window_bounds = array<i64: 1, 160>}, {pipeline_mode = #tpu.pipeline_mode<synchronous>, transform_indices = @transform_4, window_bounds = array<i64: 1, 8, 32>}, {pipeline_mode = #tpu.pipeline_mode<synchronous>, transform_indices = @transform_5, window_bounds = array<i64: 1, 8, 32>}, {transform_indices = @transform_6, window_bounds = array<i64: 1, 8, 32>}, {transform_indices = @transform_7, window_bounds = array<i64: 1, 8, 32>}, {pipeline_mode = #tpu.pipeline_mode<synchronous>, transform_indices = @transform_8, window_bounds = array<i64: 1, 8, 32>}]} {
    %c0_i32 = arith.constant 0 : i32
    %0 = arith.cmpi eq, %arg0, %c0_i32 : i32
    %1 = arith.extui %0 : i1 to i32
    %c0_i32_0 = arith.constant 0 : i32
    %2 = arith.cmpi ne, %1, %c0_i32_0 : i32
    scf.if %2 {
      %c0_24 = arith.constant 0 : index
      %c0_25 = arith.constant 0 : index
      %c0_26 = arith.constant 0 : index
      %45 = vector.load %arg5[%c0_24, %c0_25, %c0_26] : memref<1x8x32xf32, #tpu.memory_space<vmem>>, vector<1x8x32xf32>
      %46 = vector.shape_cast %45 : vector<1x8x32xf32> to vector<8x32xf32>
      %c0_27 = arith.constant 0 : index
      %c0_28 = arith.constant 0 : index
      %47 = vector.load %arg10[%c0_27, %c0_28] : memref<8x32xf32, #tpu.memory_space<vmem>>, vector<8x32xf32>
      tpu.vector_store %arg10[%c0_27, %c0_28], %46 {strides = array<i32>} : memref<8x32xf32, #tpu.memory_space<vmem>>, vector<8x32xf32>,
      %c0_29 = arith.constant 0 : index
      %c0_30 = arith.constant 0 : index
      %c0_31 = arith.constant 0 : index
      %48 = vector.load %arg6[%c0_29, %c0_30, %c0_31] : memref<1x8x32xf32, #tpu.memory_space<vmem>>, vector<1x8x32xf32>
      %49 = vector.shape_cast %48 : vector<1x8x32xf32> to vector<8x32xf32>
      %c0_32 = arith.constant 0 : index
      %c0_33 = arith.constant 0 : index
      %50 = vector.load %arg11[%c0_32, %c0_33] : memref<8x32xf32, #tpu.memory_space<vmem>>, vector<8x32xf32>
      tpu.vector_store %arg11[%c0_32, %c0_33], %49 {strides = array<i32>} : memref<8x32xf32, #tpu.memory_space<vmem>>, vector<8x32xf32>,
      %c0_34 = arith.constant 0 : index
      %c0_35 = arith.constant 0 : index
      %51 = vector.load %arg2[%c0_34, %c0_35] : memref<8x64xf32, #tpu.memory_space<vmem>>, vector<8x64xf32>
      %c0_36 = arith.constant 0 : index
      %c0_37 = arith.constant 0 : index
      %52 = vector.load %arg3[%c0_36, %c0_37] : memref<112x160xf32, #tpu.memory_space<vmem>>, vector<64x160xf32>
      %cst_38 = arith.constant dense<0.000000e+00> : vector<8x160xf32>
      %53 = tpu.matmul %51, %52, %cst_38 {dimension_numbers = #tpu.dot_dimension_numbers<[1], [0], [0], [1], [0, 0, 1, 1], [], []>} : vector<8x64xf32>, vector<64x160xf32>, vector<8x160xf32> -> vector<8x160xf32>
      %c0_39 = arith.constant 0 : index
      %c0_40 = arith.constant 0 : index
      %54 = vector.load %arg4[%c0_39, %c0_40] : memref<1x160xf32, #tpu.memory_space<vmem>>, vector<1x160xf32>
      %55 = vector.broadcast %54 : vector<1x160xf32> to vector<8x160xf32>
      %56 = arith.addf %53, %55 : vector<8x160xf32>
      %c0_41 = arith.constant 0 : index
      %c0_42 = arith.constant 0 : index
      %57 = vector.load %arg12[%c0_41, %c0_42] : memref<8x160xf32, #tpu.memory_space<vmem>>, vector<8x160xf32>
      tpu.vector_store %arg12[%c0_41, %c0_42], %56 {strides = array<i32>} : memref<8x160xf32, #tpu.memory_space<vmem>>, vector<8x160xf32>,
    } else {
    }
    %c0 = arith.constant 0 : index
    %c0_1 = arith.constant 0 : index
    %c0_2 = arith.constant 0 : index
    %3 = vector.load %arg1[%c0, %c0_1, %c0_2] : memref<1x8x1xi32, #tpu.memory_space<vmem>>, vector<1x8x1xi32>
    %4 = vector.shape_cast %3 : vector<1x8x1xi32> to vector<8x1xi32>
    %5 = tpu.iota {dimensions = array<i32: 1>} : vector<8x16xi32>
    %6 = vector.broadcast %4 : vector<8x1xi32> to vector<8x16xi32>
    %7 = arith.cmpi eq, %5, %6 : vector<8x16xi32>
    %8 = arith.extui %7 : vector<8x16xi1> to vector<8x16xi32>
    %9 = arith.sitofp %8 : vector<8x16xi32> to vector<8x16xf32>
    %c0_3 = arith.constant 0 : index
    %c0_4 = arith.constant 0 : index
    %10 = vector.load %arg10[%c0_3, %c0_4] : memref<8x32xf32, #tpu.memory_space<vmem>>, vector<8x32xf32>
    %c0_5 = arith.constant 0 : index
    %c0_6 = arith.constant 0 : index
    %11 = vector.load %arg11[%c0_5, %c0_6] : memref<8x32xf32, #tpu.memory_space<vmem>>, vector<8x32xf32>
    %12 = tpu.concatenate %9, %10 in 1 : vector<8x16xf32>, vector<8x32xf32> -> vector<8x48xf32>
    %c0_7 = arith.constant 0 : index
    %c0_8 = arith.constant 0 : index
    %13 = vector.load %arg12[%c0_7, %c0_8] : memref<8x160xf32, #tpu.memory_space<vmem>>, vector<8x160xf32>
    %c64 = arith.constant 64 : index
    %c0_9 = arith.constant 0 : index
    %14 = vector.load %arg3[%c64, %c0_9] : memref<112x160xf32, #tpu.memory_space<vmem>>, vector<48x160xf32>
    %cst = arith.constant dense<0.000000e+00> : vector<8x160xf32>
    %15 = tpu.matmul %12, %14, %cst {dimension_numbers = #tpu.dot_dimension_numbers<[1], [0], [0], [1], [0, 0, 1, 1], [], []>} : vector<8x48xf32>, vector<48x160xf32>, vector<8x160xf32> -> vector<8x160xf32>
    %16 = arith.addf %13, %15 : vector<8x160xf32>
    %17 = vector.extract_strided_slice %16 {offsets = [0, 0], sizes = [8, 96], strides = [1, 1]} : vector<8x160xf32> to vector<8x96xf32>
    %18 = arith.negf %17 : vector<8x96xf32>
    %19 = math.exp %18 : vector<8x96xf32>
    %cst_10 = arith.constant 1.000000e+00 : f32
    %20 = vector.broadcast %cst_10 : f32 to vector<8x96xf32>
    %21 = arith.addf %20, %19 : vector<8x96xf32>
    %22 = arith.divf %20, %21 : vector<8x96xf32>
    %23 = vector.extract_strided_slice %16 {offsets = [0, 96], sizes = [8, 32], strides = [1, 1]} : vector<8x160xf32> to vector<8x32xf32>
    %24 = math.tanh %23 : vector<8x32xf32>
    %25 = vector.extract_strided_slice %22 {offsets = [0, 32], sizes = [8, 32], strides = [1, 1]} : vector<8x96xf32> to vector<8x32xf32>
    %26 = arith.mulf %25, %11 : vector<8x32xf32>
    %27 = vector.extract_strided_slice %22 {offsets = [0, 0], sizes = [8, 32], strides = [1, 1]} : vector<8x96xf32> to vector<8x32xf32>
    %28 = arith.mulf %27, %24 : vector<8x32xf32>
    %29 = arith.addf %26, %28 : vector<8x32xf32>
    %30 = vector.extract_strided_slice %22 {offsets = [0, 64], sizes = [8, 32], strides = [1, 1]} : vector<8x96xf32> to vector<8x32xf32>
    %31 = math.tanh %29 : vector<8x32xf32>
    %32 = arith.mulf %30, %31 : vector<8x32xf32>
    %c0_11 = arith.constant 0 : index
    %c0_12 = arith.constant 0 : index
    %33 = vector.load %arg10[%c0_11, %c0_12] : memref<8x32xf32, #tpu.memory_space<vmem>>, vector<8x32xf32>
    tpu.vector_store %arg10[%c0_11, %c0_12], %32 {strides = array<i32>} : memref<8x32xf32, #tpu.memory_space<vmem>>, vector<8x32xf32>,
    %c0_13 = arith.constant 0 : index
    %c0_14 = arith.constant 0 : index
    %34 = vector.load %arg11[%c0_13, %c0_14] : memref<8x32xf32, #tpu.memory_space<vmem>>, vector<8x32xf32>
    tpu.vector_store %arg11[%c0_13, %c0_14], %29 {strides = array<i32>} : memref<8x32xf32, #tpu.memory_space<vmem>>, vector<8x32xf32>,
    %c0_15 = arith.constant 0 : index
    %c0_16 = arith.constant 0 : index
    %c0_17 = arith.constant 0 : index
    %35 = vector.load %arg7[%c0_15, %c0_16, %c0_17] : memref<1x8x32xf32, #tpu.memory_space<vmem>>, vector<1x8x32xf32>
    %36 = vector.shape_cast %35 : vector<1x8x32xf32> to vector<8x32xf32>
    %37 = vector.shape_cast %32 : vector<8x32xf32> to vector<1x8x32xf32>
    tpu.vector_store %arg7[%c0_15, %c0_16, %c0_17], %37 {strides = array<i32>} : memref<1x8x32xf32, #tpu.memory_space<vmem>>, vector<1x8x32xf32>,
    %38 = vector.extract_strided_slice %16 {offsets = [0, 128], sizes = [8, 32], strides = [1, 1]} : vector<8x160xf32> to vector<8x32xf32>
    %c0_18 = arith.constant 0 : index
    %c0_19 = arith.constant 0 : index
    %c0_20 = arith.constant 0 : index
    %39 = vector.load %arg8[%c0_18, %c0_19, %c0_20] : memref<1x8x32xf32, #tpu.memory_space<vmem>>, vector<1x8x32xf32>
    %40 = vector.shape_cast %39 : vector<1x8x32xf32> to vector<8x32xf32>
    %41 = vector.shape_cast %38 : vector<8x32xf32> to vector<1x8x32xf32>
    tpu.vector_store %arg8[%c0_18, %c0_19, %c0_20], %41 {strides = array<i32>} : memref<1x8x32xf32, #tpu.memory_space<vmem>>, vector<1x8x32xf32>,
    %c0_21 = arith.constant 0 : index
    %c0_22 = arith.constant 0 : index
    %c0_23 = arith.constant 0 : index
    %42 = vector.load %arg9[%c0_21, %c0_22, %c0_23] : memref<1x8x32xf32, #tpu.memory_space<vmem>>, vector<1x8x32xf32>
    %43 = vector.shape_cast %42 : vector<1x8x32xf32> to vector<8x32xf32>
    %44 = vector.shape_cast %29 : vector<8x32xf32> to vector<1x8x32xf32>
    tpu.vector_store %arg9[%c0_21, %c0_22, %c0_23], %44 {strides = array<i32>} : memref<1x8x32xf32, #tpu.memory_space<vmem>>, vector<1x8x32xf32>,
    return
  }
  func.func @transform_0(%arg0: i32) -> (i32, i32, i32) {
    %c0_i32 = arith.constant 0 : i32
    %c0_i32_0 = arith.constant 0 : i32
    %c0_i32_1 = arith.constant 0 : i32
    return %arg0, %c0_i32, %c0_i32_0 : i32, i32, i32
  }
  func.func @transform_1(%arg0: i32) -> (i32, i32) {
    %c0_i32 = arith.constant 0 : i32
    %c0_i32_0 = arith.constant 0 : i32
    %c0_i32_1 = arith.constant 0 : i32
    return %c0_i32, %c0_i32_0 : i32, i32
  }
  func.func @transform_2(%arg0: i32) -> (i32, i32) {
    %c0_i32 = arith.constant 0 : i32
    %c0_i32_0 = arith.constant 0 : i32
    %c0_i32_1 = arith.constant 0 : i32
    return %c0_i32, %c0_i32_0 : i32, i32
  }
  func.func @transform_3(%arg0: i32) -> (i32, i32) {
    %c0_i32 = arith.constant 0 : i32
    %c0_i32_0 = arith.constant 0 : i32
    %c0_i32_1 = arith.constant 0 : i32
    return %c0_i32, %c0_i32_0 : i32, i32
  }
  func.func @transform_4(%arg0: i32) -> (i32, i32, i32) {
    %c0_i32 = arith.constant 0 : i32
    %c0_i32_0 = arith.constant 0 : i32
    %c0_i32_1 = arith.constant 0 : i32
    %c0_i32_2 = arith.constant 0 : i32
    return %c0_i32, %c0_i32_0, %c0_i32_1 : i32, i32, i32
  }
  func.func @transform_5(%arg0: i32) -> (i32, i32, i32) {
    %c0_i32 = arith.constant 0 : i32
    %c0_i32_0 = arith.constant 0 : i32
    %c0_i32_1 = arith.constant 0 : i32
    %c0_i32_2 = arith.constant 0 : i32
    return %c0_i32, %c0_i32_0, %c0_i32_1 : i32, i32, i32
  }
  func.func @transform_6(%arg0: i32) -> (i32, i32, i32) {
    %c0_i32 = arith.constant 0 : i32
    %c0_i32_0 = arith.constant 0 : i32
    %c0_i32_1 = arith.constant 0 : i32
    return %arg0, %c0_i32, %c0_i32_0 : i32, i32, i32
  }
  func.func @transform_7(%arg0: i32) -> (i32, i32, i32) {
    %c0_i32 = arith.constant 0 : i32
    %c0_i32_0 = arith.constant 0 : i32
    %c0_i32_1 = arith.constant 0 : i32
    return %arg0, %c0_i32, %c0_i32_0 : i32, i32, i32
  }
  func.func @transform_8(%arg0: i32) -> (i32, i32, i32) {
    %c0_i32 = arith.constant 0 : i32
    %c0_i32_0 = arith.constant 0 : i32
    %c0_i32_1 = arith.constant 0 : i32
    %c0_i32_2 = arith.constant 0 : i32
    return %c0_i32, %c0_i32_0, %c0_i32_1 : i32, i32, i32
  }
}

</mosaic_0001>

<llo_original>
// kernel: decoder_decode_steps.1
$region0: #{decoder_decode_steps.1}
  #allocation0 [shape = 'u32[]', space=smem, size = 0x4, offset = 0x4, fixed_abs, tag = 'smem constant byte address 0x4 - core index']
  #allocation1 [shape = 'u32[144,128]{1,0:T(1,128)}', space=vmem, size = 0x12000, scoped, tag = 'internal scratch']
  #allocation2 [shape = 'f32[8,32]{1,0:T(8,128)}', space=vmem, size = 0x1000, scoped, tag = 'scratch operand']
  #allocation3 [shape = 'f32[8,32]{1,0:T(8,128)}', space=vmem, size = 0x1000, scoped, tag = 'scratch operand']
  #allocation4 [shape = 'f32[8,160]{1,0:T(8,128)}', space=vmem, size = 0x2000, scoped, tag = 'scratch operand']
  %s0 = inlined_call_operand.vmem [shape: s32[6,8,1], index: 0, kind: input, shape index: {}]
  %s1 = inlined_call_operand.vmem [shape: f32[8,64], index: 1, kind: input, shape index: {}]
  %s2 = inlined_call_operand.vmem [shape: f32[112,160], index: 2, kind: input, shape index: {}]
  %s3 = inlined_call_operand.vmem [shape: f32[1,160], index: 3, kind: input, shape index: {}]
  %s4 = inlined_call_operand.vmem [shape: f32[1,8,32], index: 4, kind: input, shape index: {}]
  %s5 = inlined_call_operand.vmem [shape: f32[1,8,32], index: 5, kind: input, shape index: {}]
  %s6 = inlined_call_operand.vmem [shape: f32[6,8,32], index: 6, kind: output, shape index: {0}]
  %s7 = inlined_call_operand.hbm [shape: f32[6,8,32], index: 7, kind: output, shape index: {1}]
  %s8 = inlined_call_operand.hbm [shape: f32[1,8,32], index: 8, kind: output, shape index: {2}]
  %9 = xla_tuple %s6, %s7, %s8
  %s10 = sld [smem:[#allocation0]]
  $region77: #{decoder_decode_steps.1} parent=0
    _
  %s12 = ssub.s32 1, %s10
  %s13 = scalar_select 0, %s12, %s10
  $region1: #{decoder_decode_steps.1} parent=0
    #allocation5 [shape = 'u8[8192]{0}', space=vmem, size = 0x2000, scoped, tag = 'output window, operand 1']
    #allocation6 [shape = 's32[2]{0}', space=sflag, size = 0x8, scoped, tag = 'scoped memory for decoder_decode_steps.1']
    #allocation7 [shape = 'u8[4096]{0}', space=vmem, size = 0x1000, scoped, tag = 'output window, operand 2, single buffered']
    #allocation8 [shape = 's32[1]{0}', space=sflag, size = 0x4, scoped, tag = 'scoped memory for decoder_decode_steps.1']
    %14 = vsyncpa [#allocation6], 0
    %s15 = scalar_lea.sflag [#allocation6], 1
    %16 = vsyncpa %s15, 0
    %17 = vsyncpa [#allocation8], 0
    loop: start=0, step=1, limit=8
    $region2: #{decoder_decode_steps.1} parent=1 // loop_pre_header
      _
    $region3: #{decoder_decode_steps.1} parent=1 // loop_header
      %s19 = sphi 0, %s23
      %p20 = scmp.ge.s32.totalorder %s19, 8
      %s29 = sphi 0, %s31
      %s32 = sphi 0, %s29
      %s33 = sphi 0, %s32
      %s49 = sphi 0, %s33
      %s53 = sphi 0, %s53
      %s55 = sphi 0, %s53
      %s56 = sphi 0, %s55
      %s70 = sphi 0, %s56
      %s74 = sphi 0, %s74
      %s76 = sphi 0, %s74
      %s77 = sphi 0, %s76
      %s91 = sphi 0, %s77
      %s95 = sphi 0, %s95
      %s97 = sphi 0, %s95
      %s98 = sphi 0, %s97
      %s112 = sphi 0, %s98
      %s116 = sphi 0, %s116
      %s118 = sphi 0, %s116
      %s119 = sphi 0, %s118
      %s133 = sphi 0, %s119
      %s137 = sphi 0, %s137
      %s139 = sphi 0, %s137
      %s140 = sphi 0, %s139
      %s154 = sphi 0, %s140
      %s160 = sphi 0, %s162
      %s163 = sphi 0, %s160
      %s164 = sphi 0, %s163
      %s180 = sphi 0, %s164
      %s186 = sphi 0, %s188
      %s189 = sphi 0, %s186
      %s190 = sphi 0, %s189
      %s206 = sphi 0, %s190
      %s210 = sphi 0, %s210
      %s212 = sphi 0, %s210
      %s213 = sphi 0, %s212
      %s227 = sphi 0, %s213
    $region4: #{decoder_decode_steps.1} parent=1 // loop_header_branch
      %22 = sbr.rel (%p20) target = $region8
    $region5: #{decoder_decode_steps.1} parent=1 // loop_body
      %s24 = ssub.s32 %s19, 1
      %s25 = ssub.s32 %s19, 2
      %s26 = sadd.s32 %s19, 1
      %s27 = ssub.s32 %s19, %s26
      %p28 = scmp.eq.s32.totalorder %s27, 0
      %s30 = sadd.s32 %s29, 1
      %s31 = scalar_select %p28, %s29, %s30
      %p34 = pneg %p28
      %p35 = scmp.eq.s32.totalorder %s19, 5
      %p36 = por %p34, %p35
      %p37 = scmp.ne.s32.totalorder %s29, %s32
      %p38 = scmp.eq.s32.totalorder %s19, 0
      %p39 = por %p37, %p38
      %p40 = scmp.ne.s32.totalorder %s29, %s32
      %p41 = scmp.eq.s32.totalorder %s24, 5
      %p42 = por %p40, %p41
      %p43 = scmp.ne.s32.totalorder %s32, %s33
      %p44 = scmp.eq.s32.totalorder %s24, 0
      %p45 = por %p43, %p44
      %p46 = scmp.ne.s32.totalorder %s32, %s33
      %p47 = scmp.eq.s32.totalorder %s25, 5
      %p48 = por %p46, %p47
      %p50 = scmp.ne.s32.totalorder %s33, %s49
      %p51 = scmp.eq.s32.totalorder %s25, 0
      %p52 = por %p50, %p51
      %s54 = sadd.s32 %s53, 1
      %p57 = scmp.eq.s32.totalorder %s19, 5
      %p58 = scmp.ne.s32.totalorder %s53, %s55
      %p59 = scmp.eq.s32.totalorder %s19, 0
      %p60 = por %p58, %p59
      %p61 = scmp.ne.s32.totalorder %s53, %s55
      %p62 = scmp.eq.s32.totalorder %s24, 5
      %p63 = por %p61, %p62
      %p64 = scmp.ne.s32.totalorder %s55, %s56
      %p65 = scmp.eq.s32.totalorder %s24, 0
      %p66 = por %p64, %p65
      %p67 = scmp.ne.s32.totalorder %s55, %s56
      %p68 = scmp.eq.s32.totalorder %s25, 5
      %p69 = por %p67, %p68
      %p71 = scmp.ne.s32.totalorder %s56, %s70
      %p72 = scmp.eq.s32.totalorder %s25, 0
      %p73 = por %p71, %p72
      %s75 = sadd.s32 %s74, 1
      %p78 = scmp.eq.s32.totalorder %s19, 5
      %p79 = scmp.ne.s32.totalorder %s74, %s76
      %p80 = scmp.eq.s32.totalorder %s19, 0
      %p81 = por %p79, %p80
      %p82 = scmp.ne.s32.totalorder %s74, %s76
      %p83 = scmp.eq.s32.totalorder %s24, 5
      %p84 = por %p82, %p83
      %p85 = scmp.ne.s32.totalorder %s76, %s77
      %p86 = scmp.eq.s32.totalorder %s24, 0
      %p87 = por %p85, %p86
      %p88 = scmp.ne.s32.totalorder %s76, %s77
      %p89 = scmp.eq.s32.totalorder %s25, 5
      %p90 = por %p88, %p89
      %p92 = scmp.ne.s32.totalorder %s77, %s91
      %p93 = scmp.eq.s32.totalorder %s25, 0
      %p94 = por %p92, %p93
      %s96 = sadd.s32 %s95, 1
      %p99 = scmp.eq.s32.totalorder %s19, 5
      %p100 = scmp.ne.s32.totalorder %s95, %s97
      %p101 = scmp.eq.s32.totalorder %s19, 0
      %p102 = por %p100, %p101
      %p103 = scmp.ne.s32.totalorder %s95, %s97
      %p104 = scmp.eq.s32.totalorder %s24, 5
      %p105 = por %p103, %p104
      %p106 = scmp.ne.s32.totalorder %s97, %s98
      %p107 = scmp.eq.s32.totalorder %s24, 0
      %p108 = por %p106, %p107
      %p109 = scmp.ne.s32.totalorder %s97, %s98
      %p110 = scmp.eq.s32.totalorder %s25, 5
      %p111 = por %p109, %p110
      %p113 = scmp.ne.s32.totalorder %s98, %s112
      %p114 = scmp.eq.s32.totalorder %s25, 0
      %p115 = por %p113, %p114
      %s117 = sadd.s32 %s116, 1
      %p120 = scmp.eq.s32.totalorder %s19, 5
      %p121 = scmp.ne.s32.totalorder %s116, %s118
      %p122 = scmp.eq.s32.totalorder %s19, 0
      %p123 = por %p121, %p122
      %p124 = scmp.ne.s32.totalorder %s116, %s118
      %p125 = scmp.eq.s32.totalorder %s24, 5
      %p126 = por %p124, %p125
      %p127 = scmp.ne.s32.totalorder %s118, %s119
      %p128 = scmp.eq.s32.totalorder %s24, 0
      %p129 = por %p127, %p128
      %p130 = scmp.ne.s32.totalorder %s118, %s119
      %p131 = scmp.eq.s32.totalorder %s25, 5
      %p132 = por %p130, %p131
      %p134 = scmp.ne.s32.totalorder %s119, %s133
      %p135 = scmp.eq.s32.totalorder %s25, 0
      %p136 = por %p134, %p135
      %s138 = sadd.s32 %s137, 1
      %p141 = scmp.eq.s32.totalorder %s19, 5
      %p142 = scmp.ne.s32.totalorder %s137, %s139
      %p143 = scmp.eq.s32.totalorder %s19, 0
      %p144 = por %p142, %p143
      %p145 = scmp.ne.s32.totalorder %s137, %s139
      %p146 = scmp.eq.s32.totalorder %s24, 5
      %p147 = por %p145, %p146
      %p148 = scmp.ne.s32.totalorder %s139, %s140
      %p149 = scmp.eq.s32.totalorder %s24, 0
      %p150 = por %p148, %p149
      %p151 = scmp.ne.s32.totalorder %s139, %s140
      %p152 = scmp.eq.s32.totalorder %s25, 5
      %p153 = por %p151, %p152
      %p155 = scmp.ne.s32.totalorder %s140, %s154
      %p156 = scmp.eq.s32.totalorder %s25, 0
      %p157 = por %p155, %p156
      %s158 = ssub.s32 %s19, %s26
      %p159 = scmp.eq.s32.totalorder %s158, 0
      %s161 = sadd.s32 %s160, 1
      %s162 = scalar_select %p159, %s160, %s161
      %p165 = pneg %p159
      %p166 = scmp.eq.s32.totalorder %s19, 5
      %p167 = por %p165, %p166
      %p168 = scmp.ne.s32.totalorder %s160, %s163
      %p169 = scmp.eq.s32.totalorder %s19, 0
      %p170 = por %p168, %p169
      %p171 = scmp.ne.s32.totalorder %s160, %s163
      %p172 = scmp.eq.s32.totalorder %s24, 5
      %p173 = por %p171, %p172
      %p174 = scmp.ne.s32.totalorder %s163, %s164
      %p175 = scmp.eq.s32.totalorder %s24, 0
      %p176 = por %p174, %p175
      %p177 = scmp.ne.s32.totalorder %s163, %s164
      %p178 = scmp.eq.s32.totalorder %s25, 5
      %p179 = por %p177, %p178
      %p181 = scmp.ne.s32.totalorder %s164, %s180
      %p182 = scmp.eq.s32.totalorder %s25, 0
      %p183 = por %p181, %p182
      %s184 = ssub.s32 %s19, %s26
      %p185 = scmp.eq.s32.totalorder %s184, 0
      %s187 = sadd.s32 %s186, 1
      %s188 = scalar_select %p185, %s186, %s187
      %p191 = pneg %p185
      %p192 = scmp.eq.s32.totalorder %s19, 5
      %p193 = por %p191, %p192
      %p194 = scmp.ne.s32.totalorder %s186, %s189
      %p195 = scmp.eq.s32.totalorder %s19, 0
      %p196 = por %p194, %p195
      %p197 = scmp.ne.s32.totalorder %s186, %s189
      %p198 = scmp.eq.s32.totalorder %s24, 5
      %p199 = por %p197, %p198
      %p200 = scmp.ne.s32.totalorder %s189, %s190
      %p201 = scmp.eq.s32.totalorder %s24, 0
      %p202 = por %p200, %p201
      %p203 = scmp.ne.s32.totalorder %s189, %s190
      %p204 = scmp.eq.s32.totalorder %s25, 5
      %p205 = por %p203, %p204
      %p207 = scmp.ne.s32.totalorder %s190, %s206
      %p208 = scmp.eq.s32.totalorder %s25, 0
      %p209 = por %p207, %p208
      %s211 = sadd.s32 %s210, 1
      %p214 = scmp.eq.s32.totalorder %s19, 5
      %p215 = scmp.ne.s32.totalorder %s210, %s212
      %p216 = scmp.eq.s32.totalorder %s19, 0
      %p217 = por %p215, %p216
      %p218 = scmp.ne.s32.totalorder %s210, %s212
      %p219 = scmp.eq.s32.totalorder %s24, 5
      %p220 = por %p218, %p219
      %p221 = scmp.ne.s32.totalorder %s212, %s213
      %p222 = scmp.eq.s32.totalorder %s24, 0
      %p223 = por %p221, %p222
      %p224 = scmp.ne.s32.totalorder %s212, %s213
      %p225 = scmp.eq.s32.totalorder %s25, 5
      %p226 = por %p224, %p225
      %p228 = scmp.ne.s32.totalorder %s213, %s227
      %p229 = scmp.eq.s32.totalorder %s25, 0
      %p230 = por %p228, %p229
      %p231 = scmp.le.s32.totalorder 1, %s19
      %p232 = scmp.lt.s32.totalorder %s19, 7
      %p233 = pnand %p231, %p232
      %p234 = pneg %p233
      // Predicated region
      $region9: #{decoder_decode_steps.1} parent=5 // pred_check
        _
      $region10: #{decoder_decode_steps.1} parent=5 // pred_check_branch
        %236 = sbr.rel (%p233) target = $region12
      $region11: #{decoder_decode_steps.1} parent=5 // pred_region
        %s237 = ssub.s32 %s19, 1
        // Predicated region
        $region13: #{decoder_decode_steps.1} parent=11 // pred_check
          %p238 = pneg %p66
        $region14: #{decoder_decode_steps.1} parent=11 // pred_check_branch
          %240 = sbr.rel (%p238) target = $region16
        $region15: #{decoder_decode_steps.1} parent=11 // pred_region
          _
        $region16: #{decoder_decode_steps.1} parent=11 // pred_fallthru
          _
        // Predicated region
        $region17: #{decoder_decode_steps.1} parent=11 // pred_check
          %p241 = pneg %p87
        $region18: #{decoder_decode_steps.1} parent=11 // pred_check_branch
          %243 = sbr.rel (%p241) target = $region20
        $region19: #{decoder_decode_steps.1} parent=11 // pred_region
          _
        $region20: #{decoder_decode_steps.1} parent=11 // pred_fallthru
          _
        // Predicated region
        $region21: #{decoder_decode_steps.1} parent=11 // pred_check
          %p244 = pneg %p108
        $region22: #{decoder_decode_steps.1} parent=11 // pred_check_branch
          %246 = sbr.rel (%p244) target = $region24
        $region23: #{decoder_decode_steps.1} parent=11 // pred_region
          _
        $region24: #{decoder_decode_steps.1} parent=11 // pred_fallthru
          _
        // Predicated region
        $region25: #{decoder_decode_steps.1} parent=11 // pred_check
          %p247 = pneg %p129
        $region26: #{decoder_decode_steps.1} parent=11 // pred_check_branch
          %249 = sbr.rel (%p247) target = $region28
        $region27: #{decoder_decode_steps.1} parent=11 // pred_region
          _
        $region28: #{decoder_decode_steps.1} parent=11 // pred_fallthru
          _
        // Predicated region
        $region29: #{decoder_decode_steps.1} parent=11 // pred_check
          %p250 = pneg %p150
        $region30: #{decoder_decode_steps.1} parent=11 // pred_check_branch
          %252 = sbr.rel (%p250) target = $region32
        $region31: #{decoder_decode_steps.1} parent=11 // pred_region
          _
        $region32: #{decoder_decode_steps.1} parent=11 // pred_fallthru
          _
      $region12: #{decoder_decode_steps.1} parent=5 // pred_fallthru
        _
      %p253 = scmp.lt.s32.totalorder %s19, 6
      // Predicated region
      $region33: #{decoder_decode_steps.1} parent=5 // pred_check
        %p254 = pneg %p253
      $region34: #{decoder_decode_steps.1} parent=5 // pred_check_branch
        %256 = sbr.rel (%p254) target = $region36
      $region35: #{decoder_decode_steps.1} parent=5 // pred_region
        // Predicated region
        $region37: #{decoder_decode_steps.1} parent=35 // pred_check
          %p257 = pneg %p39
        $region38: #{decoder_decode_steps.1} parent=35 // pred_check_branch
          %259 = sbr.rel (%p257) target = $region40
        $region39: #{decoder_decode_steps.1} parent=35 // pred_region
          %p260 = scmp.lt.s32.totalorder %s19, 5
          %s261 = scalar_select %p260, %s19, 5
          %s262 = smul.addr %s261, 8
          %s263 = scalar_lea.vmem %s0, %s262
        $region40: #{decoder_decode_steps.1} parent=35 // pred_fallthru
          _
      $region36: #{decoder_decode_steps.1} parent=5 // pred_fallthru
        _
      %p264 = scmp.le.s32.totalorder 1, %s19
      %p265 = scmp.lt.s32.totalorder %s19, 7
      %p266 = pnand %p264, %p265
      %p267 = pneg %p266
      // Predicated region
      $region41: #{decoder_decode_steps.1} parent=5 // pred_check
        _
      $region42: #{decoder_decode_steps.1} parent=5 // pred_check_branch
        %269 = sbr.rel (%p266) target = $region44
      $region43: #{decoder_decode_steps.1} parent=5 // pred_region
        %s270 = ssub.s32 %s19, 1
        %p271 = scmp.lt.s32.totalorder %s24, 5
        %s272 = scalar_select %p271, %s24, 5
        %s273 = smul.addr %s272, 8
        %s274 = scalar_lea.vmem %s0, %s273
        %p275 = pneg %p45
        %p276 = pneg %p42
        %p277 = pneg %p66
        %p278 = pneg %p63
        %p279 = pneg %p87
        %p280 = pneg %p84
        %p281 = pneg %p108
        %p282 = pneg %p105
        %p283 = pneg %p129
        %p284 = pneg %p126
        %p285 = pneg %p150
        %p286 = pneg %p147
        %p287 = pneg %p176
        %p288 = pneg %p173
        %p289 = scmp.lt.s32.totalorder %s24, 5
        %s290 = scalar_select %p289, %s24, 5
        %s291 = smul.addr %s290, 8
        %s292 = scalar_lea.vmem %s6, %s291
        %p293 = pneg %p202
        %p294 = pneg %p199
        %s295 = sand.u32 %s189, 1
        %s296 = scalar_lea.sflag [#allocation6], %s295
        %s297 = sand.u32 %s189, 1
        %s298 = smul.addr %s297, 8
        %s299 = scalar_lea.vmem [#allocation5], %s298
        %p300 = pneg %p223
        %p301 = pneg %p220
        %p302 = scmp.lt.s32.totalorder %s24, 5
        %s303 = scalar_select %p302, %s24, 5
        %s304 = smul.addr %s303, 8
        %s305 = scalar_lea.vmem %s0, %s304
        %p306 = scmp.lt.s32.totalorder %s24, 5
        %s307 = scalar_select %p306, %s24, 5
        %s308 = smul.addr %s307, 8
        %s309 = scalar_lea.vmem %s6, %s308
        %p310 = scmp.eq.s32.totalorder %s24, 0
        // Predicated region
        $region45: #{decoder_decode_steps.1} parent=43 // pred_check
          %p311 = pneg %p310
        $region46: #{decoder_decode_steps.1} parent=43 // pred_check_branch
          %313 = sbr.rel (%p311) target = $region48
        $region47: #{decoder_decode_steps.1} parent=43 // pred_region
          %v314 = vld [vmem:[%s4] sm:$0xff]
          %vm315 = vcmask 261120
          %316 = vst.msk [vmem:[#allocation2] sm:$0xff] %vm315, %v314
          %v317 = vld [vmem:[%s5] sm:$0xff]
          %318 = vst.msk [vmem:[#allocation3] sm:$0xff] %vm315, %v317
          %v319 = vld [vmem:[%s1] sm:$0xff]
          %v320 = vld [vmem:[%s2] sm:$0xff]
          %v321 = vld [vmem:[%s2 + $0x8] sm:$0xff]
          %v322 = vld [vmem:[%s2 + $0x10] sm:$0xff]
          %v323 = vld [vmem:[%s2 + $0x18] sm:$0xff]
          %v324 = vld [vmem:[%s2 + $0x20] sm:$0xff]
          %v325 = vld [vmem:[%s2 + $0x28] sm:$0xff]
          %v326 = vld [vmem:[%s2 + $0x30] sm:$0xff]
          %v327 = vld [vmem:[%s2 + $0x38] sm:$0xff]
          %v328 = vld [vmem:[%s2 + $0x40] sm:$0xff]
          %v329 = vld [vmem:[%s2 + $0x48] sm:$0xff]
          %v330 = vld [vmem:[%s2 + $0x50] sm:$0xff]
          %v331 = vld [vmem:[%s2 + $0x58] sm:$0xff]
          %v332 = vld [vmem:[%s2 + $0x60] sm:$0xff]
          %v333 = vld [vmem:[%s2 + $0x68] sm:$0xff]
          %v334 = vld [vmem:[%s2 + $0x70] sm:$0xff]
          %v335 = vld [vmem:[%s2 + $0x78] sm:$0xff]
          %v336 = vld [vmem:[%s3] sm:$0x3]
          %v338 = vlaneseq
          %v339 = vshrl.u32 %v338, 7
          %v340 = vsub.s32 0, %v339
          %v341 = vrot.slane %v336, %v340
          %v342 = vlaneseq
          %v343 = vshrl.u32 %v342, 7
          %v344 = vsub.s32 1, %v343
          %v345 = vrot.slane %v336, %v344
          %vm348 = vcmask 523264
          %v350 = vsel %vm348, %v319, 0
          %352 = vmatprep.subr.mxu0 %v321
          %353 = vmatpush1.msra.mxu0 %v320
          %354 = vmatprep.subr.mxu0 %v323
          %355 = vmatpush1.msra.mxu0 %v322
          %356 = vmatprep.subr.mxu0 %v325
          %357 = vmatpush1.msra.mxu0 %v324
          %358 = vmatprep.subr.mxu0 %v327
          %359 = vmatpush1.msra.mxu0 %v326
          %360 = vmatprep.subr.mxu0 %v329
          %361 = vmatpush1.msra.mxu0 %v328
          %362 = vmatprep.subr.mxu0 %v331
          %363 = vmatpush1.msra.mxu0 %v330
          %364 = vmatprep.subr.mxu0 %v333
          %365 = vmatpush1.msra.mxu0 %v332
          %366 = vmatprep.subr.mxu0 %v335
          %367 = vmatpush1.msra.mxu0 %v334
          %368 = vmatprep.subr.mxu0 0.0
          %369 = vmatpush1.msra.mxu0 0.0
          %370 = vmatprep.subr.mxu0 0.0
          %371 = vmatpush1.msra.mxu0 0.0
          %372 = vmatprep.subr.mxu0 0.0
          %373 = vmatpush1.msra.mxu0 0.0
          %374 = vmatprep.subr.mxu0 0.0
          %375 = vmatpush1.msra.mxu0 0.0
          %376 = vmatprep.subr.mxu0 0.0
          %377 = vmatpush1.msra.mxu0 0.0
          %378 = vmatprep.subr.mxu0 0.0
          %379 = vmatpush1.msra.mxu0 0.0
          %380 = vmatprep.subr.mxu0 0.0
          %381 = vmatpush1.msra.mxu0 0.0
          %382 = vmatprep.subr.mxu0 0.0
          %383 = vmatpush1.msra.mxu0 0.0
          %384 = vmatprep.subr.mxu0 0.0
          %385 = vmatpush1.msra.mxu0 0.0
          %386 = vmatprep.subr.mxu0 0.0
          %387 = vmatpush1.msra.mxu0 0.0
          %388 = vmatprep.subr.mxu0 0.0
          %389 = vmatpush1.msra.mxu0 0.0
          %390 = vmatprep.subr.mxu0 0.0
          %391 = vmatpush1.msra.mxu0 0.0
          %392 = vmatprep.subr.mxu0 0.0
          %393 = vmatpush1.msra.mxu0 0.0
          %394 = vmatprep.subr.mxu0 0.0
          %395 = vmatpush1.msra.mxu0 0.0
          %396 = vmatprep.subr.mxu0 0.0
          %397 = vmatpush1.msra.mxu0 0.0
          %398 = vmatprep.subr.mxu0 0.0
          %399 = vmatpush1.msra.mxu0 0.0
          %400 = vmatprep.subr.mxu0 0.0
          %401 = vmatpush1.msra.mxu0 0.0
          %402 = vmatprep.subr.mxu0 0.0
          %403 = vmatpush1.msra.mxu0 0.0
          %404 = vmatprep.subr.mxu0 0.0
          %405 = vmatpush1.msra.mxu0 0.0
          %406 = vmatprep.subr.mxu0 0.0
          %407 = vmatpush1.msra.mxu0 0.0
          %408 = vmatprep.subr.mxu0 0.0
          %409 = vmatpush1.msra.mxu0 0.0
          %410 = vmatprep.subr.mxu0 0.0
          %411 = vmatpush1.msra.mxu0 0.0
          %412 = vmatprep.subr.mxu0 0.0
          %413 = vmatpush1.msra.mxu0 0.0
          %414 = vmatprep.subr.mxu0 0.0
          %415 = vmatpush1.msra.mxu0 0.0
          %416 = vmatprep.mubr.f32.mxu0 0.0
          %417 = vmatmul.mubr.f32.gmra.mrb[0].mxu0 %v350
          %v418 = vpop.f32.mrb[0].mxu0
          %v419 = vadd.f32 %v341, %v418
          %v420 = vpop.f32.mrb[0].mxu0
          %v421 = vadd.f32 %v345, %v420
          %422 = vdwg.mxu0
          %423 = vst [vmem:[#allocation4] sm:$0xff] %v419
          %424 = vst.msk [vmem:[#allocation4 + $0x8] sm:$0xff] %vm315, %v421
        $region48: #{decoder_decode_steps.1} parent=43 // pred_fallthru
          _
        %v425 = vld [vmem:[%s305] sm:$0xff]
        %v426 = vlaneseq
        %v427 = vand.u32 %v426, 127
        %428 = vset.pattern.permute.xlu0 0
        %429 = vperm.xlu0 %428, %v425
        %v430 = vpop.permute.xlu0 %429
        %vm431 = vcmp.eq.s32.totalorder %v427, %v430
        %v432 = vsel %vm431, 1, 0
        %v433 = vcvt.s32.f32 %v432
        %v434 = vld [vmem:[#allocation2] sm:$0xff]
        %v435 = vld [vmem:[#allocation3] sm:$0xff]
        %437 = vrot.lane.b32.xlu0 %v434, 16
        %v438 = vpop.permute.xlu0 %437
        %vm440 = vcmask 130048
        %v441 = vsel %vm440, %v433, %v438
        %v442 = vld [vmem:[#allocation4] sm:$0xff]
        %v443 = vld [vmem:[#allocation4 + $0x8] sm:$0xff]
        %v444 = vld [vmem:[%s2 + $0x80] sm:$0xff]
        %v445 = vld [vmem:[%s2 + $0x88] sm:$0xff]
        %v446 = vld [vmem:[%s2 + $0x90] sm:$0xff]
        %v447 = vld [vmem:[%s2 + $0x98] sm:$0xff]
        %v448 = vld [vmem:[%s2 + $0xa0] sm:$0xff]
        %v449 = vld [vmem:[%s2 + $0xa8] sm:$0xff]
        %v450 = vld [vmem:[%s2 + $0xb0] sm:$0xff]
        %v451 = vld [vmem:[%s2 + $0xb8] sm:$0xff]
        %v452 = vld [vmem:[%s2 + $0xc0] sm:$0xff]
        %v453 = vld [vmem:[%s2 + $0xc8] sm:$0xff]
        %v454 = vld [vmem:[%s2 + $0xd0] sm:$0xff]
        %v455 = vld [vmem:[%s2 + $0xd8] sm:$0xff]
        %vm456 = vcmask 392192
        %v458 = vsel %vm456, %v441, 0
        %460 = vmatprep.subr.mxu0 %v445
        %461 = vmatpush1.msra.mxu0 %v444
        %462 = vmatprep.subr.mxu0 %v447
        %463 = vmatpush1.msra.mxu0 %v446
        %464 = vmatprep.subr.mxu0 %v449
        %465 = vmatpush1.msra.mxu0 %v448
        %466 = vmatprep.subr.mxu0 %v451
        %467 = vmatpush1.msra.mxu0 %v450
        %468 = vmatprep.subr.mxu0 %v453
        %469 = vmatpush1.msra.mxu0 %v452
        %470 = vmatprep.subr.mxu0 %v455
        %471 = vmatpush1.msra.mxu0 %v454
        %472 = vmatprep.subr.mxu0 0.0
        %473 = vmatpush1.msra.mxu0 0.0
        %474 = vmatprep.subr.mxu0 0.0
        %475 = vmatpush1.msra.mxu0 0.0
        %476 = vmatprep.subr.mxu0 0.0
        %477 = vmatpush1.msra.mxu0 0.0
        %478 = vmatprep.subr.mxu0 0.0
        %479 = vmatpush1.msra.mxu0 0.0
        %480 = vmatprep.subr.mxu0 0.0
        %481 = vmatpush1.msra.mxu0 0.0
        %482 = vmatprep.subr.mxu0 0.0
        %483 = vmatpush1.msra.mxu0 0.0
        %484 = vmatprep.subr.mxu0 0.0
        %485 = vmatpush1.msra.mxu0 0.0
        %486 = vmatprep.subr.mxu0 0.0
        %487 = vmatpush1.msra.mxu0 0.0
        %488 = vmatprep.subr.mxu0 0.0
        %489 = vmatpush1.msra.mxu0 0.0
        %490 = vmatprep.subr.mxu0 0.0
        %491 = vmatpush1.msra.mxu0 0.0
        %492 = vmatprep.subr.mxu0 0.0
        %493 = vmatpush1.msra.mxu0 0.0
        %494 = vmatprep.subr.mxu0 0.0
        %495 = vmatpush1.msra.mxu0 0.0
        %496 = vmatprep.subr.mxu0 0.0
        %497 = vmatpush1.msra.mxu0 0.0
        %498 = vmatprep.subr.mxu0 0.0
        %499 = vmatpush1.msra.mxu0 0.0
        %500 = vmatprep.subr.mxu0 0.0
        %501 = vmatpush1.msra.mxu0 0.0
        %502 = vmatprep.subr.mxu0 0.0
        %503 = vmatpush1.msra.mxu0 0.0
        %504 = vmatprep.subr.mxu0 0.0
        %505 = vmatpush1.msra.mxu0 0.0
        %506 = vmatprep.subr.mxu0 0.0
        %507 = vmatpush1.msra.mxu0 0.0
        %508 = vmatprep.subr.mxu0 0.0
        %509 = vmatpush1.msra.mxu0 0.0
        %510 = vmatprep.subr.mxu0 0.0
        %511 = vmatpush1.msra.mxu0 0.0
        %512 = vmatprep.subr.mxu0 0.0
        %513 = vmatpush1.msra.mxu0 0.0
        %514 = vmatprep.subr.mxu0 0.0
        %515 = vmatpush1.msra.mxu0 0.0
        %516 = vmatprep.subr.mxu0 0.0
        %517 = vmatpush1.msra.mxu0 0.0
        %518 = vmatprep.subr.mxu0 0.0
        %519 = vmatpush1.msra.mxu0 0.0
        %520 = vmatprep.subr.mxu0 0.0
        %521 = vmatpush1.msra.mxu0 0.0
        %522 = vmatprep.subr.mxu0 0.0
        %523 = vmatpush1.msra.mxu0 0.0
        %524 = vmatprep.mubr.f32.mxu0 0.0
        %525 = vmatmul.mubr.f32.gmra.mrb[0].mxu0 %v458
        %v526 = vpop.f32.mrb[0].mxu0
        %v527 = vadd.f32 0.0, %v526
        %v528 = vpop.f32.mrb[0].mxu0
        %v529 = vadd.f32 0.0, %v528
        %530 = vdwg.mxu0
        %v531 = vadd.f32 %v442, %v527
        %v532 = vadd.f32 %v443, %v529
        %v533 = vxor.u32 %v531, 2147483648
        %v534 = vmul.f32 %v533, 1.442695
        %v535 = vpow.pop %v534
        %v536 = vadd.f32 %v535, 1.0
        %v537 = vrcp.pop %v536
        %v538 = vmul.f32 1.0, %v537
        %v539 = vtanh.pop %v531
        %541 = vrot.lane.b32.xlu0 %v435, 32
        %v542 = vpop.permute.xlu0 %541
        %v544 = vmul.f32 %v538, %v542
        %546 = vrot.lane.b32.xlu0 %v539, 32
        %v547 = vpop.permute.xlu0 %546
        %v549 = vmul.f32 %v538, %v547
        %551 = vrot.lane.b32.xlu0 %v549, 32
        %v552 = vpop.permute.xlu0 %551
        %v554 = vadd.f32 %v544, %v552
        %v555 = vtanh.pop %v554
        %557 = vrot.lane.b32.xlu0 %v555, 32
        %v558 = vpop.permute.xlu0 %557
        %v560 = vmul.f32 %v538, %v558
        %562 = vrot.lane.b32.xlu0 %v560, 64
        %v563 = vpop.permute.xlu0 %562
        %vm565 = vcmask 261120
        %566 = vst.msk [vmem:[#allocation2] sm:$0xff] %vm565, %v563
        %568 = vrot.lane.b32.xlu0 %v554, 96
        %v569 = vpop.permute.xlu0 %568
        %571 = vst.msk [vmem:[#allocation3] sm:$0xff] %vm565, %v569
        %572 = vst.msk [vmem:[%s309] sm:$0xff] %vm565, %v563
        %573 = vst.msk [vmem:[%s299] sm:$0xff] %vm565, %v532
        %574 = vst.msk [vmem:[#allocation7] sm:$0xff] %vm565, %v569
        %p575 = scmp.lt.s32.totalorder %s24, 5
        %s576 = scalar_select %p575, %s24, 5
        %s577 = smul.addr %s576, 8
        %s578 = scalar_lea.vmem %s6, %s577
        %s579 = sand.u32 %s189, 1
        %s580 = scalar_lea.sflag [#allocation6], %s579
        %s581 = sand.u32 %s189, 1
        %s582 = smul.addr %s581, 8
        %s583 = scalar_lea.vmem [#allocation5], %s582
        // Predicated region
        $region49: #{decoder_decode_steps.1} parent=43 // pred_check
          %p584 = pneg %p173
        $region50: #{decoder_decode_steps.1} parent=43 // pred_check_branch
          %586 = sbr.rel (%p584) target = $region52
        $region51: #{decoder_decode_steps.1} parent=43 // pred_region
          _
        $region52: #{decoder_decode_steps.1} parent=43 // pred_fallthru
          _
        // Predicated region
        $region53: #{decoder_decode_steps.1} parent=43 // pred_check
          %p587 = pneg %p199
        $region54: #{decoder_decode_steps.1} parent=43 // pred_check_branch
          %589 = sbr.rel (%p587) target = $region56
        $region55: #{decoder_decode_steps.1} parent=43 // pred_region
          %s591 = ssub.s32 128, 128
          %592 = vsyncadd %s580, %s591
          %s593 = smul.addr %s24, 128
          %s594 = scalar_lea.hbm %s7, %s593
          %s596 = sshll.u32 %s583, 4
          %s597 = int_to_ptr.vmem [resolvable:$true] %s596
          %599 = dma.vmem_to_hbm [thread:$0]  %s597, 128, %s594, %s580
        $region56: #{decoder_decode_steps.1} parent=43 // pred_fallthru
          _
        // Predicated region
        $region57: #{decoder_decode_steps.1} parent=43 // pred_check
          %p600 = pneg %p220
        $region58: #{decoder_decode_steps.1} parent=43 // pred_check_branch
          %602 = sbr.rel (%p600) target = $region60
        $region59: #{decoder_decode_steps.1} parent=43 // pred_region
          %s604 = ssub.s32 128, 128
          %605 = vsyncadd [#allocation8], %s604
          %s607 = sshll.u32 [#allocation7], 4
          %s608 = int_to_ptr.vmem [resolvable:$true] %s607
          %610 = dma.vmem_to_hbm [thread:$0]  %s608, 128, %s8, [#allocation8]
        $region60: #{decoder_decode_steps.1} parent=43 // pred_fallthru
          _
        // Predicated region
        $region61: #{decoder_decode_steps.1} parent=43 // pred_check
          %p611 = pneg %p220
        $region62: #{decoder_decode_steps.1} parent=43 // pred_check_branch
          %613 = sbr.rel (%p611) target = $region64
        $region63: #{decoder_decode_steps.1} parent=43 // pred_region
          %614 = dma.done [#allocation8], 128
        $region64: #{decoder_decode_steps.1} parent=43 // pred_fallthru
          _
      $region44: #{decoder_decode_steps.1} parent=5 // pred_fallthru
        _
      %p615 = scmp.le.s32.totalorder 2, %s19
      // Predicated region
      $region65: #{decoder_decode_steps.1} parent=5 // pred_check
        %p616 = pneg %p615
      $region66: #{decoder_decode_steps.1} parent=5 // pred_check_branch
        %618 = sbr.rel (%p616) target = $region68
      $region67: #{decoder_decode_steps.1} parent=5 // pred_region
        %s619 = ssub.s32 %s19, 2
        // Predicated region
        $region69: #{decoder_decode_steps.1} parent=67 // pred_check
          %p620 = pneg %p179
        $region70: #{decoder_decode_steps.1} parent=67 // pred_check_branch
          %622 = sbr.rel (%p620) target = $region72
        $region71: #{decoder_decode_steps.1} parent=67 // pred_region
          %p623 = scmp.lt.s32.totalorder %s25, 5
          %s624 = scalar_select %p623, %s25, 5
          %s625 = smul.addr %s624, 8
          %s626 = scalar_lea.vmem %s6, %s625
        $region72: #{decoder_decode_steps.1} parent=67 // pred_fallthru
          _
        // Predicated region
        $region73: #{decoder_decode_steps.1} parent=67 // pred_check
          %p627 = pneg %p205
        $region74: #{decoder_decode_steps.1} parent=67 // pred_check_branch
          %629 = sbr.rel (%p627) target = $region76
        $region75: #{decoder_decode_steps.1} parent=67 // pred_region
          %s630 = sand.u32 %s190, 1
          %s631 = scalar_lea.sflag [#allocation6], %s630
          %s632 = sand.u32 %s190, 1
          %s633 = smul.addr %s632, 8
          %s634 = scalar_lea.vmem [#allocation5], %s633
          %635 = dma.done %s631, 128
        $region76: #{decoder_decode_steps.1} parent=67 // pred_fallthru
          _
      $region68: #{decoder_decode_steps.1} parent=5 // pred_fallthru
        _
    $region6: #{decoder_decode_steps.1} parent=1 // loop_footer
      %s23 = sadd.s32 1, %s19
    $region7: #{decoder_decode_steps.1} parent=1 // loop_footer_branch
      %18 = sbr.rel target = $region3
    $region8: #{decoder_decode_steps.1} parent=1 // loop_exit
      _
    %636 = vsyncpa [#allocation6], 1
    %s637 = scalar_lea.sflag [#allocation6], 1
    %638 = vsyncpa %s637, 1
    %639 = vsyncpa [#allocation8], 1

</llo_original>
